<compile_context>
chip_gen: v7x
topology: tpu7x:2x2x1
jax: 0.10.0
libtpu: 0.0.40
codegen_flags: <defaults>
</compile_context>

<pallas_src>
import functools
import math

import jax
import jax.numpy as jnp
from jax.experimental import pallas as pl
from jax.experimental.pallas import tpu as pltpu


# ----------------------------------------------------------------------------
# Kernel
# ----------------------------------------------------------------------------
def _sdpa_kernel(q_ref, k_ref, v_ref, ctx_ref, score_ref, *, scale,
                 compute_dtype):
    # q_ref:      (1, H, tq, d)
    # k_ref/v_ref:(1, H, L,  d)
    # ctx_ref:    (1, H, tq, d)
    # score_ref:  (1, H, tq, L)
    q = q_ref[0].astype(compute_dtype)            # (H, tq, d)
    k = k_ref[0].astype(compute_dtype)            # (H, L,  d)
    v = v_ref[0].astype(compute_dtype)            # (H, L,  d)

    # QK^T: contract the shared last dim (no materialized transpose).
    s = jnp.einsum("hqd,hkd->hqk", q, k,
                   preferred_element_type=jnp.float32)   # (H, tq, L) f32
    s = s * scale

    # Softmax along the key axis, in f32 (max-subtraction is mathematically
    # identical to torch.nn.Softmax(dim=-1)).
    s = s - jnp.max(s, axis=-1, keepdims=True)
    p = jnp.exp(s)
    p = p * pl.reciprocal(jnp.sum(p, axis=-1, keepdims=True), approx=True)

    score_ref[0] = p.astype(score_ref.dtype)

    # context = P @ V, head-batched, f32 accumulation on the MXU.
    ctx = jnp.einsum("hqk,hkd->hqd", p.astype(compute_dtype), v,
                     preferred_element_type=jnp.float32)  # (H, tq, d)
    ctx_ref[0] = ctx.astype(ctx_ref.dtype)


# ----------------------------------------------------------------------------
# Wrapper
# ----------------------------------------------------------------------------
def sdpa_pallas(q, k, v, *, q_tile=256, compute_dtype=None):
    """Scaled dot-product attention.

    q, k, v: [B, H, L, d]  ->  (context [B, H, L, d], score [B, H, L, L])
    `compute_dtype` controls the MXU operand dtype (e.g. jnp.bfloat16);
    accumulation and softmax math are always float32.
    """
    B, H, L, d = q.shape
    assert k.shape == (B, H, L, d) and v.shape == (B, H, L, d)
    if compute_dtype is None:
        compute_dtype = q.dtype

    # q-tile must be a multiple of 8 (sublane) or the full extent.
    tq = L if (L <= q_tile or L % q_tile != 0) else q_tile
    grid = (B, L // tq)

    kernel = functools.partial(
        _sdpa_kernel, scale=1.0 / math.sqrt(d), compute_dtype=compute_dtype)

    ctx, score = pl.pallas_call(
        kernel,
        out_shape=(
            jax.ShapeDtypeStruct((B, H, L, d), q.dtype),
            jax.ShapeDtypeStruct((B, H, L, L), q.dtype),
        ),
        grid=grid,
        in_specs=[
            pl.BlockSpec((1, H, tq, d), lambda b, i: (b, 0, i, 0)),
            pl.BlockSpec((1, H, L, d), lambda b, i: (b, 0, 0, 0)),
            pl.BlockSpec((1, H, L, d), lambda b, i: (b, 0, 0, 0)),
        ],
        out_specs=(
            pl.BlockSpec((1, H, tq, d), lambda b, i: (b, 0, i, 0)),
            pl.BlockSpec((1, H, tq, L), lambda b, i: (b, 0, i, 0)),
        ),
        compiler_params=pltpu.CompilerParams(
            dimension_semantics=("parallel", "parallel")),
    )(q, k, v)
    return ctx, score


# ----------------------------------------------------------------------------
# Pure-JAX reference for sanity checking.
# ----------------------------------------------------------------------------
def _reference(q, k, v):
    d = q.shape[-1]
    score = jnp.einsum("bhqd,bhkd->bhqk", q, k) / math.sqrt(d)
    score = jax.nn.softmax(score, axis=-1)
    ctx = jnp.einsum("bhqk,bhkd->bhqd", score, v)
    return ctx, score


if __name__ == "__main__":
    batch, head, length, d_tensor = 2, 4, 8, 8   # d_model=32, n_head=4

    key = jax.random.PRNGKey(0)
    kq, kk, kv = jax.random.split(key, 3)
    q = jax.random.normal(kq, (batch, head, length, d_tensor), jnp.float32)
    k = jax.random.normal(kk, (batch, head, length, d_tensor), jnp.float32)
    v = jax.random.normal(kv, (batch, head, length, d_tensor), jnp.float32)

    ctx_ref, score_ref = _reference(q, k, v)

    # Default path: MXU operands in the input dtype (f32 here).
    ctx, score = jax.block_until_ready(sdpa_pallas(q, k, v))
    assert ctx.shape == (batch, head, length, d_tensor)
    assert score.shape == (batch, head, length, length)
    assert jnp.allclose(ctx, ctx_ref, atol=5e-3, rtol=5e-3)
    assert jnp.allclose(score, score_ref, atol=5e-3, rtol=5e-3)

    # Fast path for v6e/v7x: bf16 MXU operands, f32 accumulation.
    ctx16, score16 = jax.block_until_ready(
        sdpa_pallas(q, k, v, compute_dtype=jnp.bfloat16))
    assert jnp.allclose(ctx16, ctx_ref, atol=5e-2, rtol=5e-2)
    assert jnp.allclose(score16, score_ref, atol=5e-2, rtol=5e-2)

    print("KERNEL_OK")
</pallas_src>

<mosaic_0001>
module attributes {stable_mosaic.version = 11 : i64} {
  func.func @_sdpa_kernel(%arg0: i32, %arg1: i32, %arg2: memref<1x4x8x8xf32, #tpu.memory_space<vmem>>, %arg3: memref<1x4x8x8xf32, #tpu.memory_space<vmem>>, %arg4: memref<1x4x8x8xf32, #tpu.memory_space<vmem>>, %arg5: memref<1x4x8x8xf32, #tpu.memory_space<vmem>>, %arg6: memref<1x4x8x8xf32, #tpu.memory_space<vmem>>) attributes {dimension_semantics = [#tpu.dimension_semantics<parallel>, #tpu.dimension_semantics<parallel>], iteration_bounds = array<i64: 2, 1>, scalar_prefetch = 0 : i64, scratch_operands = 0 : i64, tpu.core_type = #tpu.core_type<tc>, window_params = [{transform_indices = @transform_0, window_bounds = array<i64: 1, 4, 8, 8>}, {transform_indices = @transform_1, window_bounds = array<i64: 1, 4, 8, 8>}, {transform_indices = @transform_2, window_bounds = array<i64: 1, 4, 8, 8>}, {transform_indices = @transform_3, window_bounds = array<i64: 1, 4, 8, 8>}, {transform_indices = @transform_4, window_bounds = array<i64: 1, 4, 8, 8>}]} {
    %c0 = arith.constant 0 : index
    %c0_0 = arith.constant 0 : index
    %c0_1 = arith.constant 0 : index
    %c0_2 = arith.constant 0 : index
    %0 = vector.load %arg2[%c0, %c0_0, %c0_1, %c0_2] : memref<1x4x8x8xf32, #tpu.memory_space<vmem>>, vector<1x4x8x8xf32>
    %1 = vector.shape_cast %0 : vector<1x4x8x8xf32> to vector<4x8x8xf32>
    %c0_3 = arith.constant 0 : index
    %c0_4 = arith.constant 0 : index
    %c0_5 = arith.constant 0 : index
    %c0_6 = arith.constant 0 : index
    %2 = vector.load %arg3[%c0_3, %c0_4, %c0_5, %c0_6] : memref<1x4x8x8xf32, #tpu.memory_space<vmem>>, vector<1x4x8x8xf32>
    %3 = vector.shape_cast %2 : vector<1x4x8x8xf32> to vector<4x8x8xf32>
    %c0_7 = arith.constant 0 : index
    %c0_8 = arith.constant 0 : index
    %c0_9 = arith.constant 0 : index
    %c0_10 = arith.constant 0 : index
    %4 = vector.load %arg4[%c0_7, %c0_8, %c0_9, %c0_10] : memref<1x4x8x8xf32, #tpu.memory_space<vmem>>, vector<1x4x8x8xf32>
    %5 = vector.shape_cast %4 : vector<1x4x8x8xf32> to vector<4x8x8xf32>
    "tpu.trace_start"() <{level = 10 : i32, message = "hqd,hkd->hqk"}> : () -> ()
    %cst = arith.constant dense<0.000000e+00> : vector<4x8x8xf32>
    %6 = tpu.matmul %1, %3, %cst {dimension_numbers = #tpu.dot_dimension_numbers<[2], [2], [1], [1], [0, 0, 0, 1, 1, 1], [0], [0]>} : vector<4x8x8xf32>, vector<4x8x8xf32>, vector<4x8x8xf32> -> vector<4x8x8xf32>
    "tpu.trace_stop"() : () -> ()
    %cst_11 = arith.constant 0.353553385 : f32
    %7 = vector.broadcast %cst_11 : f32 to vector<4x8x8xf32>
    %8 = arith.mulf %6, %7 : vector<4x8x8xf32>
    %cst_12 = arith.constant dense<0xFF800000> : vector<4x8xf32>
    %9 = vector.multi_reduction <maximumf>, %8, %cst_12 [2] : vector<4x8x8xf32> to vector<4x8xf32>
    %10 = vector.shape_cast %9 : vector<4x8xf32> to vector<4x8x1xf32>
    %11 = vector.broadcast %10 : vector<4x8x1xf32> to vector<4x8x8xf32>
    %12 = arith.subf %8, %11 : vector<4x8x8xf32>
    %13 = math.exp %12 : vector<4x8x8xf32>
    %cst_13 = arith.constant dense<0.000000e+00> : vector<4x8xf32>
    %14 = vector.multi_reduction <add>, %13, %cst_13 [2] : vector<4x8x8xf32> to vector<4x8xf32>
    %15 = vector.shape_cast %14 : vector<4x8xf32> to vector<4x8x1xf32>
    %16 = tpu.reciprocal %15 {approx = true} : vector<4x8x1xf32> -> vector<4x8x1xf32>
    %17 = vector.broadcast %16 : vector<4x8x1xf32> to vector<4x8x8xf32>
    %18 = arith.mulf %13, %17 : vector<4x8x8xf32>
    %c0_14 = arith.constant 0 : index
    %c0_15 = arith.constant 0 : index
    %c0_16 = arith.constant 0 : index
    %c0_17 = arith.constant 0 : index
    %19 = vector.load %arg6[%c0_14, %c0_15, %c0_16, %c0_17] : memref<1x4x8x8xf32, #tpu.memory_space<vmem>>, vector<1x4x8x8xf32>
    %20 = vector.shape_cast %19 : vector<1x4x8x8xf32> to vector<4x8x8xf32>
    %21 = vector.shape_cast %18 : vector<4x8x8xf32> to vector<1x4x8x8xf32>
    tpu.vector_store %arg6[%c0_14, %c0_15, %c0_16, %c0_17], %21 {strides = array<i32>} : memref<1x4x8x8xf32, #tpu.memory_space<vmem>>, vector<1x4x8x8xf32>,
    "tpu.trace_start"() <{level = 10 : i32, message = "hqk,hkd->hqd"}> : () -> ()
    %cst_18 = arith.constant dense<0.000000e+00> : vector<4x8x8xf32>
    %22 = tpu.matmul %18, %5, %cst_18 {dimension_numbers = #tpu.dot_dimension_numbers<[2], [1], [1], [2], [0, 0, 0, 1, 1, 2], [0], [0]>} : vector<4x8x8xf32>, vector<4x8x8xf32>, vector<4x8x8xf32> -> vector<4x8x8xf32>
    "tpu.trace_stop"() : () -> ()
    %c0_19 = arith.constant 0 : index
    %c0_20 = arith.constant 0 : index
    %c0_21 = arith.constant 0 : index
    %c0_22 = arith.constant 0 : index
    %23 = vector.load %arg5[%c0_19, %c0_20, %c0_21, %c0_22] : memref<1x4x8x8xf32, #tpu.memory_space<vmem>>, vector<1x4x8x8xf32>
    %24 = vector.shape_cast %23 : vector<1x4x8x8xf32> to vector<4x8x8xf32>
    %25 = vector.shape_cast %22 : vector<4x8x8xf32> to vector<1x4x8x8xf32>
    tpu.vector_store %arg5[%c0_19, %c0_20, %c0_21, %c0_22], %25 {strides = array<i32>} : memref<1x4x8x8xf32, #tpu.memory_space<vmem>>, vector<1x4x8x8xf32>,
    return
  }
  func.func @transform_0(%arg0: i32, %arg1: i32) -> (i32, i32, i32, i32) {
    %c0_i32 = arith.constant 0 : i32
    %c0_i32_0 = arith.constant 0 : i32
    %c0_i32_1 = arith.constant 0 : i32
    return %arg0, %c0_i32, %arg1, %c0_i32_0 : i32, i32, i32, i32
  }
  func.func @transform_1(%arg0: i32, %arg1: i32) -> (i32, i32, i32, i32) {
    %c0_i32 = arith.constant 0 : i32
    %c0_i32_0 = arith.constant 0 : i32
    %c0_i32_1 = arith.constant 0 : i32
    %c0_i32_2 = arith.constant 0 : i32
    return %arg0, %c0_i32, %c0_i32_0, %c0_i32_1 : i32, i32, i32, i32
  }
  func.func @transform_2(%arg0: i32, %arg1: i32) -> (i32, i32, i32, i32) {
    %c0_i32 = arith.constant 0 : i32
    %c0_i32_0 = arith.constant 0 : i32
    %c0_i32_1 = arith.constant 0 : i32
    %c0_i32_2 = arith.constant 0 : i32
    return %arg0, %c0_i32, %c0_i32_0, %c0_i32_1 : i32, i32, i32, i32
  }
  func.func @transform_3(%arg0: i32, %arg1: i32) -> (i32, i32, i32, i32) {
    %c0_i32 = arith.constant 0 : i32
    %c0_i32_0 = arith.constant 0 : i32
    %c0_i32_1 = arith.constant 0 : i32
    return %arg0, %c0_i32, %arg1, %c0_i32_0 : i32, i32, i32, i32
  }
  func.func @transform_4(%arg0: i32, %arg1: i32) -> (i32, i32, i32, i32) {
    %c0_i32 = arith.constant 0 : i32
    %c0_i32_0 = arith.constant 0 : i32
    %c0_i32_1 = arith.constant 0 : i32
    return %arg0, %c0_i32, %arg1, %c0_i32_0 : i32, i32, i32, i32
  }
}

</mosaic_0001>

<llo_original>
// kernel: tpu_custom_call.1
$region0: #{tpu_custom_call.1}
  #allocation0 [shape = 'u32[]', space=smem, size = 0x4, offset = 0x4, fixed_abs, tag = 'smem constant byte address 0x4 - core index']
  #allocation1 [shape = 'u32[144,128]{1,0:T(1,128)}', space=vmem, size = 0x12000, scoped, tag = 'internal scratch']
  %s0 = inlined_call_operand.hbm [shape: f32[2,4,8,8], index: 0, kind: input, shape index: {}]
  %s1 = inlined_call_operand.hbm [shape: f32[2,4,8,8], index: 1, kind: input, shape index: {}]
  %s2 = inlined_call_operand.hbm [shape: f32[2,4,8,8], index: 2, kind: input, shape index: {}]
  %s3 = inlined_call_operand.hbm [shape: f32[2,4,8,8], index: 3, kind: output, shape index: {0}]
  %s4 = inlined_call_operand.hbm [shape: f32[2,4,8,8], index: 4, kind: output, shape index: {1}]
  %5 = xla_tuple %s3, %s4
  %s6 = sld [smem:[#allocation0]]
  $region65: #{tpu_custom_call.1} parent=0
    _
  %s8 = ssub.s32 1, %s6
  %s9 = scalar_select 0, %s8, %s6
  $region1: #{tpu_custom_call.1} parent=0
    #allocation2 [shape = 'u8[32768]{0}', space=vmem, size = 0x8000, scoped, tag = 'input window, operand 0']
    #allocation3 [shape = 's32[2]{0}', space=sflag, size = 0x8, scoped, tag = 'scoped memory for tpu_custom_call.1']
    #allocation4 [shape = 's32[2]{0}', space=sflag, size = 0x8, scoped, tag = 'scoped memory for tpu_custom_call.1']
    #allocation5 [shape = 'u8[32768]{0}', space=vmem, size = 0x8000, scoped, tag = 'input window, operand 1']
    #allocation6 [shape = 's32[2]{0}', space=sflag, size = 0x8, scoped, tag = 'scoped memory for tpu_custom_call.1']
    #allocation7 [shape = 'u8[32768]{0}', space=vmem, size = 0x8000, scoped, tag = 'input window, operand 2']
    #allocation8 [shape = 'u8[32768]{0}', space=vmem, size = 0x8000, scoped, tag = 'output window, operand 0']
    #allocation9 [shape = 'u8[32768]{0}', space=vmem, size = 0x8000, scoped, tag = 'output window, operand 1']
    #allocation10 [shape = 's32[2]{0}', space=sflag, size = 0x8, scoped, tag = 'scoped memory for tpu_custom_call.1']
    %10 = vsyncpa [#allocation3], 0
    %s11 = scalar_lea.sflag [#allocation3], 1
    %12 = vsyncpa %s11, 0
    %13 = vsyncpa [#allocation6], 0
    %s14 = scalar_lea.sflag [#allocation6], 1
    %15 = vsyncpa %s14, 0
    %16 = vsyncpa [#allocation4], 0
    %s17 = scalar_lea.sflag [#allocation4], 1
    %18 = vsyncpa %s17, 0
    %19 = vsyncpa [#allocation10], 0
    %s20 = scalar_lea.sflag [#allocation10], 1
    %21 = vsyncpa %s20, 0
    loop: start=0, step=1, limit=4
    $region2: #{tpu_custom_call.1} parent=1 // loop_pre_header
      _
    $region3: #{tpu_custom_call.1} parent=1 // loop_header
      %s23 = sphi 0, %s27
      %p24 = scmp.ge.s32.totalorder %s23, 4
      %s30 = sphi 0, %s42
      %s31 = sphi 0, %s38
      %s32 = sphi 0, %s30
      %s33 = sphi 0, %s31
      %s34 = sphi 0, %s32
      %s35 = sphi 0, %s33
      %s47 = sphi 0, %s49
      %s50 = sphi 0, %s47
      %s51 = sphi 0, %s50
      %s67 = sphi 0, %s51
      %s73 = sphi 0, %s75
      %s76 = sphi 0, %s73
      %s77 = sphi 0, %s76
      %s93 = sphi 0, %s77
      %s99 = sphi 0, %s101
      %s102 = sphi 0, %s99
      %s103 = sphi 0, %s102
      %s119 = sphi 0, %s103
      %s127 = sphi 0, %s129
      %s130 = sphi 0, %s127
      %s131 = sphi 0, %s130
      %s147 = sphi 0, %s131
      %s155 = sphi 0, %s157
      %s158 = sphi 0, %s155
      %s159 = sphi 0, %s158
      %s175 = sphi 0, %s159
    $region4: #{tpu_custom_call.1} parent=1 // loop_header_branch
      %26 = sbr.rel (%p24) target = $region8
    $region5: #{tpu_custom_call.1} parent=1 // loop_body
      %s28 = ssub.s32 %s23, 1
      %s29 = ssub.s32 %s23, 2
      %s36 = sadd.s32 1, %s31
      %p37 = scmp.ge.s32.totalorder %s36, 1
      %s38 = scalar_select %p37, 0, %s36
      %s39 = sadd.s32 1, %s30
      %s40 = scalar_select %p37, %s39, %s30
      %p41 = scmp.ge.s32.totalorder %s40, 2
      %s42 = scalar_select %p41, 0, %s40
      %s43 = ssub.s32 %s30, %s42
      %s44 = ssub.s32 %s31, %s38
      %s45 = sor.u32 %s43, %s44
      %p46 = scmp.eq.s32.totalorder %s45, 0
      %s48 = sadd.s32 %s47, 1
      %s49 = scalar_select %p46, %s47, %s48
      %p52 = pneg %p46
      %p53 = scmp.eq.s32.totalorder %s23, 1
      %p54 = por %p52, %p53
      %p55 = scmp.ne.s32.totalorder %s47, %s50
      %p56 = scmp.eq.s32.totalorder %s23, 0
      %p57 = por %p55, %p56
      %p58 = scmp.ne.s32.totalorder %s47, %s50
      %p59 = scmp.eq.s32.totalorder %s28, 1
      %p60 = por %p58, %p59
      %p61 = scmp.ne.s32.totalorder %s50, %s51
      %p62 = scmp.eq.s32.totalorder %s28, 0
      %p63 = por %p61, %p62
      %p64 = scmp.ne.s32.totalorder %s50, %s51
      %p65 = scmp.eq.s32.totalorder %s29, 1
      %p66 = por %p64, %p65
      %p68 = scmp.ne.s32.totalorder %s51, %s67
      %p69 = scmp.eq.s32.totalorder %s29, 0
      %p70 = por %p68, %p69
      %s71 = ssub.s32 %s30, %s42
      %p72 = scmp.eq.s32.totalorder %s71, 0
      %s74 = sadd.s32 %s73, 1
      %s75 = scalar_select %p72, %s73, %s74
      %p78 = pneg %p72
      %p79 = scmp.eq.s32.totalorder %s23, 1
      %p80 = por %p78, %p79
      %p81 = scmp.ne.s32.totalorder %s73, %s76
      %p82 = scmp.eq.s32.totalorder %s23, 0
      %p83 = por %p81, %p82
      %p84 = scmp.ne.s32.totalorder %s73, %s76
      %p85 = scmp.eq.s32.totalorder %s28, 1
      %p86 = por %p84, %p85
      %p87 = scmp.ne.s32.totalorder %s76, %s77
      %p88 = scmp.eq.s32.totalorder %s28, 0
      %p89 = por %p87, %p88
      %p90 = scmp.ne.s32.totalorder %s76, %s77
      %p91 = scmp.eq.s32.totalorder %s29, 1
      %p92 = por %p90, %p91
      %p94 = scmp.ne.s32.totalorder %s77, %s93
      %p95 = scmp.eq.s32.totalorder %s29, 0
      %p96 = por %p94, %p95
      %s97 = ssub.s32 %s30, %s42
      %p98 = scmp.eq.s32.totalorder %s97, 0
      %s100 = sadd.s32 %s99, 1
      %s101 = scalar_select %p98, %s99, %s100
      %p104 = pneg %p98
      %p105 = scmp.eq.s32.totalorder %s23, 1
      %p106 = por %p104, %p105
      %p107 = scmp.ne.s32.totalorder %s99, %s102
      %p108 = scmp.eq.s32.totalorder %s23, 0
      %p109 = por %p107, %p108
      %p110 = scmp.ne.s32.totalorder %s99, %s102
      %p111 = scmp.eq.s32.totalorder %s28, 1
      %p112 = por %p110, %p111
      %p113 = scmp.ne.s32.totalorder %s102, %s103
      %p114 = scmp.eq.s32.totalorder %s28, 0
      %p115 = por %p113, %p114
      %p116 = scmp.ne.s32.totalorder %s102, %s103
      %p117 = scmp.eq.s32.totalorder %s29, 1
      %p118 = por %p116, %p117
      %p120 = scmp.ne.s32.totalorder %s103, %s119
      %p121 = scmp.eq.s32.totalorder %s29, 0
      %p122 = por %p120, %p121
      %s123 = ssub.s32 %s30, %s42
      %s124 = ssub.s32 %s31, %s38
      %s125 = sor.u32 %s123, %s124
      %p126 = scmp.eq.s32.totalorder %s125, 0
      %s128 = sadd.s32 %s127, 1
      %s129 = scalar_select %p126, %s127, %s128
      %p132 = pneg %p126
      %p133 = scmp.eq.s32.totalorder %s23, 1
      %p134 = por %p132, %p133
      %p135 = scmp.ne.s32.totalorder %s127, %s130
      %p136 = scmp.eq.s32.totalorder %s23, 0
      %p137 = por %p135, %p136
      %p138 = scmp.ne.s32.totalorder %s127, %s130
      %p139 = scmp.eq.s32.totalorder %s28, 1
      %p140 = por %p138, %p139
      %p141 = scmp.ne.s32.totalorder %s130, %s131
      %p142 = scmp.eq.s32.totalorder %s28, 0
      %p143 = por %p141, %p142
      %p144 = scmp.ne.s32.totalorder %s130, %s131
      %p145 = scmp.eq.s32.totalorder %s29, 1
      %p146 = por %p144, %p145
      %p148 = scmp.ne.s32.totalorder %s131, %s147
      %p149 = scmp.eq.s32.totalorder %s29, 0
      %p150 = por %p148, %p149
      %s151 = ssub.s32 %s30, %s42
      %s152 = ssub.s32 %s31, %s38
      %s153 = sor.u32 %s151, %s152
      %p154 = scmp.eq.s32.totalorder %s153, 0
      %s156 = sadd.s32 %s155, 1
      %s157 = scalar_select %p154, %s155, %s156
      %p160 = pneg %p154
      %p161 = scmp.eq.s32.totalorder %s23, 1
      %p162 = por %p160, %p161
      %p163 = scmp.ne.s32.totalorder %s155, %s158
      %p164 = scmp.eq.s32.totalorder %s23, 0
      %p165 = por %p163, %p164
      %p166 = scmp.ne.s32.totalorder %s155, %s158
      %p167 = scmp.eq.s32.totalorder %s28, 1
      %p168 = por %p166, %p167
      %p169 = scmp.ne.s32.totalorder %s158, %s159
      %p170 = scmp.eq.s32.totalorder %s28, 0
      %p171 = por %p169, %p170
      %p172 = scmp.ne.s32.totalorder %s158, %s159
      %p173 = scmp.eq.s32.totalorder %s29, 1
      %p174 = por %p172, %p173
      %p176 = scmp.ne.s32.totalorder %s159, %s175
      %p177 = scmp.eq.s32.totalorder %s29, 0
      %p178 = por %p176, %p177
      %p179 = scmp.le.s32.totalorder 1, %s23
      %p180 = scmp.lt.s32.totalorder %s23, 3
      %p181 = pnand %p179, %p180
      %p182 = pneg %p181
      // Predicated region
      $region9: #{tpu_custom_call.1} parent=5 // pred_check
        _
      $region10: #{tpu_custom_call.1} parent=5 // pred_check_branch
        %184 = sbr.rel (%p181) target = $region12
      $region11: #{tpu_custom_call.1} parent=5 // pred_region
        %s185 = ssub.s32 %s23, 1
      $region12: #{tpu_custom_call.1} parent=5 // pred_fallthru
        _
      %p186 = scmp.lt.s32.totalorder %s23, 2
      // Predicated region
      $region13: #{tpu_custom_call.1} parent=5 // pred_check
        %p187 = pneg %p186
      $region14: #{tpu_custom_call.1} parent=5 // pred_check_branch
        %189 = sbr.rel (%p187) target = $region16
      $region15: #{tpu_custom_call.1} parent=5 // pred_region
        // Predicated region
        $region17: #{tpu_custom_call.1} parent=15 // pred_check
          %p190 = pneg %p57
        $region18: #{tpu_custom_call.1} parent=15 // pred_check_branch
          %192 = sbr.rel (%p190) target = $region20
        $region19: #{tpu_custom_call.1} parent=15 // pred_region
          %s193 = sand.u32 %s47, 1
          %s194 = scalar_lea.sflag [#allocation3], %s193
          %s195 = sand.u32 %s47, 1
          %s196 = smul.addr %s195, 32
          %s197 = scalar_lea.vmem [#allocation2], %s196
          %s199 = ssub.s32 512, 512
          %200 = vsyncadd %s194, %s199
          %s201 = smul.addr %s30, 4
          %s202 = sadd.s32 %s31, %s201
          %s203 = smul.addr %s202, 128
          %s204 = scalar_lea.hbm %s0, %s203
          %s205 = sshll.u32 %s197, 4
          %s206 = int_to_ptr.vmem [resolvable:$true] %s205
          %211 = dma.hbm_to_vmem [thread:$0]  %s204, 512, %s206, %s194, 128, 128, 8
        $region20: #{tpu_custom_call.1} parent=15 // pred_fallthru
          _
        // Predicated region
        $region21: #{tpu_custom_call.1} parent=15 // pred_check
          %p212 = pneg %p83
        $region22: #{tpu_custom_call.1} parent=15 // pred_check_branch
          %214 = sbr.rel (%p212) target = $region24
        $region23: #{tpu_custom_call.1} parent=15 // pred_region
          %s215 = sand.u32 %s23, 1
          %s216 = scalar_lea.sflag [#allocation6], %s215
          %s217 = sand.u32 %s73, 1
          %s218 = smul.addr %s217, 32
          %s219 = scalar_lea.vmem [#allocation5], %s218
          %s221 = ssub.s32 512, 512
          %222 = vsyncadd %s216, %s221
          %s223 = smul.addr %s30, 4
          %s224 = smul.addr %s223, 128
          %s225 = scalar_lea.hbm %s1, %s224
          %s226 = sshll.u32 %s219, 4
          %s227 = int_to_ptr.vmem [resolvable:$true] %s226
          %232 = dma.hbm_to_vmem [thread:$0]  %s225, 512, %s227, %s216, 128, 128, 8
        $region24: #{tpu_custom_call.1} parent=15 // pred_fallthru
          _
        // Predicated region
        $region25: #{tpu_custom_call.1} parent=15 // pred_check
          %p233 = pneg %p109
        $region26: #{tpu_custom_call.1} parent=15 // pred_check_branch
          %235 = sbr.rel (%p233) target = $region28
        $region27: #{tpu_custom_call.1} parent=15 // pred_region
          %s236 = sand.u32 %s23, 1
          %s237 = scalar_lea.sflag [#allocation6], %s236
          %s238 = sand.u32 %s99, 1
          %s239 = smul.addr %s238, 32
          %s240 = scalar_lea.vmem [#allocation7], %s239
          %s242 = ssub.s32 512, 512
          %243 = vsyncadd %s237, %s242
          %s244 = smul.addr %s30, 4
          %s245 = smul.addr %s244, 128
          %s246 = scalar_lea.hbm %s2, %s245
          %s247 = sshll.u32 %s240, 4
          %s248 = int_to_ptr.vmem [resolvable:$true] %s247
          %253 = dma.hbm_to_vmem [thread:$0]  %s246, 512, %s248, %s237, 128, 128, 8
        $region28: #{tpu_custom_call.1} parent=15 // pred_fallthru
          _
      $region16: #{tpu_custom_call.1} parent=5 // pred_fallthru
        _
      %p254 = scmp.le.s32.totalorder 1, %s23
      %p255 = scmp.lt.s32.totalorder %s23, 3
      %p256 = pnand %p254, %p255
      %p257 = pneg %p256
      // Predicated region
      $region29: #{tpu_custom_call.1} parent=5 // pred_check
        _
      $region30: #{tpu_custom_call.1} parent=5 // pred_check_branch
        %259 = sbr.rel (%p256) target = $region32
      $region31: #{tpu_custom_call.1} parent=5 // pred_region
        %s260 = ssub.s32 %s23, 1
        %s261 = sand.u32 %s50, 1
        %s262 = scalar_lea.sflag [#allocation3], %s261
        %s263 = sand.u32 %s50, 1
        %s264 = smul.addr %s263, 32
        %s265 = scalar_lea.vmem [#allocation2], %s264
        // Predicated region
        $region33: #{tpu_custom_call.1} parent=31 // pred_check
          %p266 = pneg %p63
        $region34: #{tpu_custom_call.1} parent=31 // pred_check_branch
          %268 = sbr.rel (%p266) target = $region36
        $region35: #{tpu_custom_call.1} parent=31 // pred_region
          %269 = dma.done %s262, 512
        $region36: #{tpu_custom_call.1} parent=31 // pred_fallthru
          _
        %s270 = sand.u32 %s28, 1
        %s271 = scalar_lea.sflag [#allocation6], %s270
        %s272 = sand.u32 %s76, 1
        %s273 = smul.addr %s272, 32
        %s274 = scalar_lea.vmem [#allocation5], %s273
        // Predicated region
        $region37: #{tpu_custom_call.1} parent=31 // pred_check
          %p275 = pneg %p89
        $region38: #{tpu_custom_call.1} parent=31 // pred_check_branch
          %277 = sbr.rel (%p275) target = $region40
        $region39: #{tpu_custom_call.1} parent=31 // pred_region
          %278 = dma.done %s271, 512
        $region40: #{tpu_custom_call.1} parent=31 // pred_fallthru
          _
        %s279 = sand.u32 %s28, 1
        %s280 = scalar_lea.sflag [#allocation6], %s279
        %s281 = sand.u32 %s102, 1
        %s282 = smul.addr %s281, 32
        %s283 = scalar_lea.vmem [#allocation7], %s282
        // Predicated region
        $region41: #{tpu_custom_call.1} parent=31 // pred_check
          %p284 = pneg %p115
        $region42: #{tpu_custom_call.1} parent=31 // pred_check_branch
          %286 = sbr.rel (%p284) target = $region44
        $region43: #{tpu_custom_call.1} parent=31 // pred_region
          %287 = dma.done %s280, 512
        $region44: #{tpu_custom_call.1} parent=31 // pred_fallthru
          _
        %s288 = sand.u32 %s50, 1
        %s289 = scalar_lea.sflag [#allocation3], %s288
        %s290 = sand.u32 %s50, 1
        %s291 = smul.addr %s290, 32
        %s292 = scalar_lea.vmem [#allocation2], %s291
        %p293 = pneg %p63
        %p294 = pneg %p60
        %s295 = sand.u32 %s28, 1
        %s296 = scalar_lea.sflag [#allocation6], %s295
        %s297 = sand.u32 %s76, 1
        %s298 = smul.addr %s297, 32
        %s299 = scalar_lea.vmem [#allocation5], %s298
        %p300 = pneg %p89
        %p301 = pneg %p86
        %s302 = sand.u32 %s28, 1
        %s303 = scalar_lea.sflag [#allocation6], %s302
        %s304 = sand.u32 %s102, 1
        %s305 = smul.addr %s304, 32
        %s306 = scalar_lea.vmem [#allocation7], %s305
        %p307 = pneg %p115
        %p308 = pneg %p112
        %p309 = pneg %p143
        %p310 = pneg %p140
        %s311 = sand.u32 %s130, 1
        %s312 = scalar_lea.sflag [#allocation4], %s311
        %s313 = sand.u32 %s130, 1
        %s314 = smul.addr %s313, 32
        %s315 = scalar_lea.vmem [#allocation8], %s314
        %p316 = pneg %p171
        %p317 = pneg %p168
        %s318 = sand.u32 %s158, 1
        %s319 = scalar_lea.sflag [#allocation10], %s318
        %s320 = sand.u32 %s158, 1
        %s321 = smul.addr %s320, 32
        %s322 = scalar_lea.vmem [#allocation9], %s321
        %v323 = vld [vmem:[%s265] sm:$0xff]
        %v324 = vld [vmem:[%s265 + $0x8] sm:$0xff]
        %v325 = vld [vmem:[%s265 + $0x10] sm:$0xff]
        %v326 = vld [vmem:[%s265 + $0x18] sm:$0xff]
        %v327 = vld [vmem:[%s274] sm:$0xff]
        %v328 = vld [vmem:[%s274 + $0x8] sm:$0xff]
        %v329 = vld [vmem:[%s274 + $0x10] sm:$0xff]
        %v330 = vld [vmem:[%s274 + $0x18] sm:$0xff]
        %v331 = vld [vmem:[%s283] sm:$0xff]
        %v332 = vld [vmem:[%s283 + $0x8] sm:$0xff]
        %v333 = vld [vmem:[%s283 + $0x10] sm:$0xff]
        %v334 = vld [vmem:[%s283 + $0x18] sm:$0xff]
        %vm335 = vcmask 64512
        %v337 = vsel %vm335, %v323, 0
        %v340 = vsel %vm335, %v327, 0
        %342 = vmatprep.subr.mxu0 0.0
        %343 = vmatpush1.xpose.msra.mxu0 %v340
        %344 = vmatprep.subr.mxu0 0.0
        %345 = vmatpush1.xpose.msra.mxu0 0.0
        %346 = vmatprep.subr.mxu0 0.0
        %347 = vmatpush1.xpose.msra.mxu0 0.0
        %348 = vmatprep.subr.mxu0 0.0
        %349 = vmatpush1.xpose.msra.mxu0 0.0
        %350 = vmatprep.subr.mxu0 0.0
        %351 = vmatpush1.xpose.msra.mxu0 0.0
        %352 = vmatprep.subr.mxu0 0.0
        %353 = vmatpush1.xpose.msra.mxu0 0.0
        %354 = vmatprep.subr.mxu0 0.0
        %355 = vmatpush1.xpose.msra.mxu0 0.0
        %356 = vmatprep.subr.mxu0 0.0
        %357 = vmatpush1.xpose.msra.mxu0 0.0
        %358 = vmatprep.subr.mxu0 0.0
        %359 = vmatpush1.xpose.msra.mxu0 0.0
        %360 = vmatprep.subr.mxu0 0.0
        %361 = vmatpush1.xpose.msra.mxu0 0.0
        %362 = vmatprep.subr.mxu0 0.0
        %363 = vmatpush1.xpose.msra.mxu0 0.0
        %364 = vmatprep.subr.mxu0 0.0
        %365 = vmatpush1.xpose.msra.mxu0 0.0
        %366 = vmatprep.subr.mxu0 0.0
        %367 = vmatpush1.xpose.msra.mxu0 0.0
        %368 = vmatprep.subr.mxu0 0.0
        %369 = vmatpush1.xpose.msra.mxu0 0.0
        %370 = vmatprep.subr.mxu0 0.0
        %371 = vmatpush1.xpose.msra.mxu0 0.0
        %372 = vmatprep.subr.mxu0 0.0
        %373 = vmatpush1.xpose.msra.mxu0 0.0
        %374 = vmatprep.subr.mxu0 0.0
        %375 = vmatpush1.xpose.msra.mxu0 0.0
        %376 = vmatprep.subr.mxu0 0.0
        %377 = vmatpush1.xpose.msra.mxu0 0.0
        %378 = vmatprep.subr.mxu0 0.0
        %379 = vmatpush1.xpose.msra.mxu0 0.0
        %380 = vmatprep.subr.mxu0 0.0
        %381 = vmatpush1.xpose.msra.mxu0 0.0
        %382 = vmatprep.subr.mxu0 0.0
        %383 = vmatpush1.xpose.msra.mxu0 0.0
        %384 = vmatprep.subr.mxu0 0.0
        %385 = vmatpush1.xpose.msra.mxu0 0.0
        %386 = vmatprep.subr.mxu0 0.0
        %387 = vmatpush1.xpose.msra.mxu0 0.0
        %388 = vmatprep.subr.mxu0 0.0
        %389 = vmatpush1.xpose.msra.mxu0 0.0
        %390 = vmatprep.subr.mxu0 0.0
        %391 = vmatpush1.xpose.msra.mxu0 0.0
        %392 = vmatprep.subr.mxu0 0.0
        %393 = vmatpush1.xpose.msra.mxu0 0.0
        %394 = vmatprep.subr.mxu0 0.0
        %395 = vmatpush1.xpose.msra.mxu0 0.0
        %396 = vmatprep.subr.mxu0 0.0
        %397 = vmatpush1.xpose.msra.mxu0 0.0
        %398 = vmatprep.subr.mxu0 0.0
        %399 = vmatpush1.xpose.msra.mxu0 0.0
        %400 = vmatprep.subr.mxu0 0.0
        %401 = vmatpush1.xpose.msra.mxu0 0.0
        %402 = vmatprep.subr.mxu0 0.0
        %403 = vmatpush1.xpose.msra.mxu0 0.0
        %404 = vmatprep.subr.mxu0 0.0
        %405 = vmatpush1.xpose.msra.mxu0 0.0
        %406 = vmatprep.mubr.f32.mxu0 0.0
        %407 = vmatmul.mubr.f32.gmra.mrb[0].mxu0 %v337
        %v408 = vpop.f32.mrb[0].mxu0
        %v409 = vadd.f32 0.0, %v408
        %v410 = vpop.f32.mrb[0].mxu0
        %411 = vdwg.mxu0
        %v413 = vsel %vm335, %v324, 0
        %v416 = vsel %vm335, %v328, 0
        %418 = vmatprep.subr.mxu0 0.0
        %419 = vmatpush1.xpose.msra.mxu0 %v416
        %420 = vmatprep.subr.mxu0 0.0
        %421 = vmatpush1.xpose.msra.mxu0 0.0
        %422 = vmatprep.subr.mxu0 0.0
        %423 = vmatpush1.xpose.msra.mxu0 0.0
        %424 = vmatprep.subr.mxu0 0.0
        %425 = vmatpush1.xpose.msra.mxu0 0.0
        %426 = vmatprep.subr.mxu0 0.0
        %427 = vmatpush1.xpose.msra.mxu0 0.0
        %428 = vmatprep.subr.mxu0 0.0
        %429 = vmatpush1.xpose.msra.mxu0 0.0
        %430 = vmatprep.subr.mxu0 0.0
        %431 = vmatpush1.xpose.msra.mxu0 0.0
        %432 = vmatprep.subr.mxu0 0.0
        %433 = vmatpush1.xpose.msra.mxu0 0.0
        %434 = vmatprep.subr.mxu0 0.0
        %435 = vmatpush1.xpose.msra.mxu0 0.0
        %436 = vmatprep.subr.mxu0 0.0
        %437 = vmatpush1.xpose.msra.mxu0 0.0
        %438 = vmatprep.subr.mxu0 0.0
        %439 = vmatpush1.xpose.msra.mxu0 0.0
        %440 = vmatprep.subr.mxu0 0.0
        %441 = vmatpush1.xpose.msra.mxu0 0.0
        %442 = vmatprep.subr.mxu0 0.0
        %443 = vmatpush1.xpose.msra.mxu0 0.0
        %444 = vmatprep.subr.mxu0 0.0
        %445 = vmatpush1.xpose.msra.mxu0 0.0
        %446 = vmatprep.subr.mxu0 0.0
        %447 = vmatpush1.xpose.msra.mxu0 0.0
        %448 = vmatprep.subr.mxu0 0.0
        %449 = vmatpush1.xpose.msra.mxu0 0.0
        %450 = vmatprep.subr.mxu0 0.0
        %451 = vmatpush1.xpose.msra.mxu0 0.0
        %452 = vmatprep.subr.mxu0 0.0
        %453 = vmatpush1.xpose.msra.mxu0 0.0
        %454 = vmatprep.subr.mxu0 0.0
        %455 = vmatpush1.xpose.msra.mxu0 0.0
        %456 = vmatprep.subr.mxu0 0.0
        %457 = vmatpush1.xpose.msra.mxu0 0.0
        %458 = vmatprep.subr.mxu0 0.0
        %459 = vmatpush1.xpose.msra.mxu0 0.0
        %460 = vmatprep.subr.mxu0 0.0
        %461 = vmatpush1.xpose.msra.mxu0 0.0
        %462 = vmatprep.subr.mxu0 0.0
        %463 = vmatpush1.xpose.msra.mxu0 0.0
        %464 = vmatprep.subr.mxu0 0.0
        %465 = vmatpush1.xpose.msra.mxu0 0.0
        %466 = vmatprep.subr.mxu0 0.0
        %467 = vmatpush1.xpose.msra.mxu0 0.0
        %468 = vmatprep.subr.mxu0 0.0
        %469 = vmatpush1.xpose.msra.mxu0 0.0
        %470 = vmatprep.subr.mxu0 0.0
        %471 = vmatpush1.xpose.msra.mxu0 0.0
        %472 = vmatprep.subr.mxu0 0.0
        %473 = vmatpush1.xpose.msra.mxu0 0.0
        %474 = vmatprep.subr.mxu0 0.0
        %475 = vmatpush1.xpose.msra.mxu0 0.0
        %476 = vmatprep.subr.mxu0 0.0
        %477 = vmatpush1.xpose.msra.mxu0 0.0
        %478 = vmatprep.subr.mxu0 0.0
        %479 = vmatpush1.xpose.msra.mxu0 0.0
        %480 = vmatprep.subr.mxu0 0.0
        %481 = vmatpush1.xpose.msra.mxu0 0.0
        %482 = vmatprep.mubr.f32.mxu0 0.0
        %483 = vmatmul.mubr.f32.gmra.mrb[0].mxu0 %v413
        %v484 = vpop.f32.mrb[0].mxu0
        %v485 = vadd.f32 0.0, %v484
        %v486 = vpop.f32.mrb[0].mxu0
        %487 = vdwg.mxu0
        %v489 = vsel %vm335, %v325, 0
        %v492 = vsel %vm335, %v329, 0
        %494 = vmatprep.subr.mxu0 0.0
        %495 = vmatpush1.xpose.msra.mxu0 %v492
        %496 = vmatprep.subr.mxu0 0.0
        %497 = vmatpush1.xpose.msra.mxu0 0.0
        %498 = vmatprep.subr.mxu0 0.0
        %499 = vmatpush1.xpose.msra.mxu0 0.0
        %500 = vmatprep.subr.mxu0 0.0
        %501 = vmatpush1.xpose.msra.mxu0 0.0
        %502 = vmatprep.subr.mxu0 0.0
        %503 = vmatpush1.xpose.msra.mxu0 0.0
        %504 = vmatprep.subr.mxu0 0.0
        %505 = vmatpush1.xpose.msra.mxu0 0.0
        %506 = vmatprep.subr.mxu0 0.0
        %507 = vmatpush1.xpose.msra.mxu0 0.0
        %508 = vmatprep.subr.mxu0 0.0
        %509 = vmatpush1.xpose.msra.mxu0 0.0
        %510 = vmatprep.subr.mxu0 0.0
        %511 = vmatpush1.xpose.msra.mxu0 0.0
        %512 = vmatprep.subr.mxu0 0.0
        %513 = vmatpush1.xpose.msra.mxu0 0.0
        %514 = vmatprep.subr.mxu0 0.0
        %515 = vmatpush1.xpose.msra.mxu0 0.0
        %516 = vmatprep.subr.mxu0 0.0
        %517 = vmatpush1.xpose.msra.mxu0 0.0
        %518 = vmatprep.subr.mxu0 0.0
        %519 = vmatpush1.xpose.msra.mxu0 0.0
        %520 = vmatprep.subr.mxu0 0.0
        %521 = vmatpush1.xpose.msra.mxu0 0.0
        %522 = vmatprep.subr.mxu0 0.0
        %523 = vmatpush1.xpose.msra.mxu0 0.0
        %524 = vmatprep.subr.mxu0 0.0
        %525 = vmatpush1.xpose.msra.mxu0 0.0
        %526 = vmatprep.subr.mxu0 0.0
        %527 = vmatpush1.xpose.msra.mxu0 0.0
        %528 = vmatprep.subr.mxu0 0.0
        %529 = vmatpush1.xpose.msra.mxu0 0.0
        %530 = vmatprep.subr.mxu0 0.0
        %531 = vmatpush1.xpose.msra.mxu0 0.0
        %532 = vmatprep.subr.mxu0 0.0
        %533 = vmatpush1.xpose.msra.mxu0 0.0
        %534 = vmatprep.subr.mxu0 0.0
        %535 = vmatpush1.xpose.msra.mxu0 0.0
        %536 = vmatprep.subr.mxu0 0.0
        %537 = vmatpush1.xpose.msra.mxu0 0.0
        %538 = vmatprep.subr.mxu0 0.0
        %539 = vmatpush1.xpose.msra.mxu0 0.0
        %540 = vmatprep.subr.mxu0 0.0
        %541 = vmatpush1.xpose.msra.mxu0 0.0
        %542 = vmatprep.subr.mxu0 0.0
        %543 = vmatpush1.xpose.msra.mxu0 0.0
        %544 = vmatprep.subr.mxu0 0.0
        %545 = vmatpush1.xpose.msra.mxu0 0.0
        %546 = vmatprep.subr.mxu0 0.0
        %547 = vmatpush1.xpose.msra.mxu0 0.0
        %548 = vmatprep.subr.mxu0 0.0
        %549 = vmatpush1.xpose.msra.mxu0 0.0
        %550 = vmatprep.subr.mxu0 0.0
        %551 = vmatpush1.xpose.msra.mxu0 0.0
        %552 = vmatprep.subr.mxu0 0.0
        %553 = vmatpush1.xpose.msra.mxu0 0.0
        %554 = vmatprep.subr.mxu0 0.0
        %555 = vmatpush1.xpose.msra.mxu0 0.0
        %556 = vmatprep.subr.mxu0 0.0
        %557 = vmatpush1.xpose.msra.mxu0 0.0
        %558 = vmatprep.mubr.f32.mxu0 0.0
        %559 = vmatmul.mubr.f32.gmra.mrb[0].mxu0 %v489
        %v560 = vpop.f32.mrb[0].mxu0
        %v561 = vadd.f32 0.0, %v560
        %v562 = vpop.f32.mrb[0].mxu0
        %563 = vdwg.mxu0
        %v565 = vsel %vm335, %v326, 0
        %v568 = vsel %vm335, %v330, 0
        %570 = vmatprep.subr.mxu0 0.0
        %571 = vmatpush1.xpose.msra.mxu0 %v568
        %572 = vmatprep.subr.mxu0 0.0
        %573 = vmatpush1.xpose.msra.mxu0 0.0
        %574 = vmatprep.subr.mxu0 0.0
        %575 = vmatpush1.xpose.msra.mxu0 0.0
        %576 = vmatprep.subr.mxu0 0.0
        %577 = vmatpush1.xpose.msra.mxu0 0.0
        %578 = vmatprep.subr.mxu0 0.0
        %579 = vmatpush1.xpose.msra.mxu0 0.0
        %580 = vmatprep.subr.mxu0 0.0
        %581 = vmatpush1.xpose.msra.mxu0 0.0
        %582 = vmatprep.subr.mxu0 0.0
        %583 = vmatpush1.xpose.msra.mxu0 0.0
        %584 = vmatprep.subr.mxu0 0.0
        %585 = vmatpush1.xpose.msra.mxu0 0.0
        %586 = vmatprep.subr.mxu0 0.0
        %587 = vmatpush1.xpose.msra.mxu0 0.0
        %588 = vmatprep.subr.mxu0 0.0
        %589 = vmatpush1.xpose.msra.mxu0 0.0
        %590 = vmatprep.subr.mxu0 0.0
        %591 = vmatpush1.xpose.msra.mxu0 0.0
        %592 = vmatprep.subr.mxu0 0.0
        %593 = vmatpush1.xpose.msra.mxu0 0.0
        %594 = vmatprep.subr.mxu0 0.0
        %595 = vmatpush1.xpose.msra.mxu0 0.0
        %596 = vmatprep.subr.mxu0 0.0
        %597 = vmatpush1.xpose.msra.mxu0 0.0
        %598 = vmatprep.subr.mxu0 0.0
        %599 = vmatpush1.xpose.msra.mxu0 0.0
        %600 = vmatprep.subr.mxu0 0.0
        %601 = vmatpush1.xpose.msra.mxu0 0.0
        %602 = vmatprep.subr.mxu0 0.0
        %603 = vmatpush1.xpose.msra.mxu0 0.0
        %604 = vmatprep.subr.mxu0 0.0
        %605 = vmatpush1.xpose.msra.mxu0 0.0
        %606 = vmatprep.subr.mxu0 0.0
        %607 = vmatpush1.xpose.msra.mxu0 0.0
        %608 = vmatprep.subr.mxu0 0.0
        %609 = vmatpush1.xpose.msra.mxu0 0.0
        %610 = vmatprep.subr.mxu0 0.0
        %611 = vmatpush1.xpose.msra.mxu0 0.0
        %612 = vmatprep.subr.mxu0 0.0
        %613 = vmatpush1.xpose.msra.mxu0 0.0
        %614 = vmatprep.subr.mxu0 0.0
        %615 = vmatpush1.xpose.msra.mxu0 0.0
        %616 = vmatprep.subr.mxu0 0.0
        %617 = vmatpush1.xpose.msra.mxu0 0.0
        %618 = vmatprep.subr.mxu0 0.0
        %619 = vmatpush1.xpose.msra.mxu0 0.0
        %620 = vmatprep.subr.mxu0 0.0
        %621 = vmatpush1.xpose.msra.mxu0 0.0
        %622 = vmatprep.subr.mxu0 0.0
        %623 = vmatpush1.xpose.msra.mxu0 0.0
        %624 = vmatprep.subr.mxu0 0.0
        %625 = vmatpush1.xpose.msra.mxu0 0.0
        %626 = vmatprep.subr.mxu0 0.0
        %627 = vmatpush1.xpose.msra.mxu0 0.0
        %628 = vmatprep.subr.mxu0 0.0
        %629 = vmatpush1.xpose.msra.mxu0 0.0
        %630 = vmatprep.subr.mxu0 0.0
        %631 = vmatpush1.xpose.msra.mxu0 0.0
        %632 = vmatprep.subr.mxu0 0.0
        %633 = vmatpush1.xpose.msra.mxu0 0.0
        %634 = vmatprep.mubr.f32.mxu0 0.0
        %635 = vmatmul.mubr.f32.gmra.mrb[0].mxu0 %v565
        %v636 = vpop.f32.mrb[0].mxu0
        %v637 = vadd.f32 0.0, %v636
        %v638 = vpop.f32.mrb[0].mxu0
        %639 = vdwg.mxu0
        %v640 = vmul.f32 %v409, 0.35355338
        %v641 = vmul.f32 %v485, 0.35355338
        %v642 = vmul.f32 %v561, 0.35355338
        %v643 = vmul.f32 %v637, 0.35355338
        %v644 = vsel %vm335, %v640, -inf
        %645 = vmax.xlane.f32.xlu0 %v644
        %v646 = vpop.xlane.xlu0 %645
        %v647 = vsel %vm335, %v641, -inf
        %648 = vmax.xlane.f32.xlu0 %v647
        %v649 = vpop.xlane.xlu0 %648
        %v650 = vsel %vm335, %v642, -inf
        %651 = vmax.xlane.f32.xlu0 %v650
        %v652 = vpop.xlane.xlu0 %651
        %v653 = vsel %vm335, %v643, -inf
        %654 = vmax.xlane.f32.xlu0 %v653
        %v655 = vpop.xlane.xlu0 %654
        %v656 = vsub.f32 %v640, %v646
        %v657 = vsub.f32 %v641, %v649
        %v658 = vsub.f32 %v642, %v652
        %v659 = vsub.f32 %v643, %v655
        %v660 = vmul.f32 %v656, 1.442695
        %v661 = vpow.pop %v660
        %v662 = vmul.f32 %v657, 1.442695
        %v663 = vpow.pop %v662
        %v664 = vmul.f32 %v658, 1.442695
        %v665 = vpow.pop %v664
        %v666 = vmul.f32 %v659, 1.442695
        %v667 = vpow.pop %v666
        %v668 = vsel %vm335, %v661, 0.0
        %669 = vadd.xlane.f32.xlu0 %v668
        %v670 = vpop.xlane.xlu0 %669
        %v671 = vsel %vm335, %v663, 0.0
        %672 = vadd.xlane.f32.xlu0 %v671
        %v673 = vpop.xlane.xlu0 %672
        %v674 = vsel %vm335, %v665, 0.0
        %675 = vadd.xlane.f32.xlu0 %v674
        %v676 = vpop.xlane.xlu0 %675
        %v677 = vsel %vm335, %v667, 0.0
        %678 = vadd.xlane.f32.xlu0 %v677
        %v679 = vpop.xlane.xlu0 %678
        %v680 = vrcp.pop %v670
        %v681 = vrcp.pop %v673
        %v682 = vrcp.pop %v676
        %v683 = vrcp.pop %v679
        %v684 = vmul.f32 %v661, %v680
        %v685 = vmul.f32 %v663, %v681
        %v686 = vmul.f32 %v665, %v682
        %v687 = vmul.f32 %v667, %v683
        %688 = vst.msk [vmem:[%s322] sm:$0xff] %vm335, %v684
        %689 = vst.msk [vmem:[%s322 + $0x8] sm:$0xff] %vm335, %v685
        %690 = vst.msk [vmem:[%s322 + $0x10] sm:$0xff] %vm335, %v686
        %691 = vst.msk [vmem:[%s322 + $0x18] sm:$0xff] %vm335, %v687
        %v693 = vsel %vm335, %v684, 0
        %695 = vmatprep.subr.mxu0 0.0
        %696 = vmatpush1.msra.mxu0 %v331
        %697 = vmatprep.subr.mxu0 0.0
        %698 = vmatpush1.msra.mxu0 0.0
        %699 = vmatprep.subr.mxu0 0.0
        %700 = vmatpush1.msra.mxu0 0.0
        %701 = vmatprep.subr.mxu0 0.0
        %702 = vmatpush1.msra.mxu0 0.0
        %703 = vmatprep.subr.mxu0 0.0
        %704 = vmatpush1.msra.mxu0 0.0
        %705 = vmatprep.subr.mxu0 0.0
        %706 = vmatpush1.msra.mxu0 0.0
        %707 = vmatprep.subr.mxu0 0.0
        %708 = vmatpush1.msra.mxu0 0.0
        %709 = vmatprep.subr.mxu0 0.0
        %710 = vmatpush1.msra.mxu0 0.0
        %711 = vmatprep.subr.mxu0 0.0
        %712 = vmatpush1.msra.mxu0 0.0
        %713 = vmatprep.subr.mxu0 0.0
        %714 = vmatpush1.msra.mxu0 0.0
        %715 = vmatprep.subr.mxu0 0.0
        %716 = vmatpush1.msra.mxu0 0.0
        %717 = vmatprep.subr.mxu0 0.0
        %718 = vmatpush1.msra.mxu0 0.0
        %719 = vmatprep.subr.mxu0 0.0
        %720 = vmatpush1.msra.mxu0 0.0
        %721 = vmatprep.subr.mxu0 0.0
        %722 = vmatpush1.msra.mxu0 0.0
        %723 = vmatprep.subr.mxu0 0.0
        %724 = vmatpush1.msra.mxu0 0.0
        %725 = vmatprep.subr.mxu0 0.0
        %726 = vmatpush1.msra.mxu0 0.0
        %727 = vmatprep.subr.mxu0 0.0
        %728 = vmatpush1.msra.mxu0 0.0
        %729 = vmatprep.subr.mxu0 0.0
        %730 = vmatpush1.msra.mxu0 0.0
        %731 = vmatprep.subr.mxu0 0.0
        %732 = vmatpush1.msra.mxu0 0.0
        %733 = vmatprep.subr.mxu0 0.0
        %734 = vmatpush1.msra.mxu0 0.0
        %735 = vmatprep.subr.mxu0 0.0
        %736 = vmatpush1.msra.mxu0 0.0
        %737 = vmatprep.subr.mxu0 0.0
        %738 = vmatpush1.msra.mxu0 0.0
        %739 = vmatprep.subr.mxu0 0.0
        %740 = vmatpush1.msra.mxu0 0.0
        %741 = vmatprep.subr.mxu0 0.0
        %742 = vmatpush1.msra.mxu0 0.0
        %743 = vmatprep.subr.mxu0 0.0
        %744 = vmatpush1.msra.mxu0 0.0
        %745 = vmatprep.subr.mxu0 0.0
        %746 = vmatpush1.msra.mxu0 0.0
        %747 = vmatprep.subr.mxu0 0.0
        %748 = vmatpush1.msra.mxu0 0.0
        %749 = vmatprep.subr.mxu0 0.0
        %750 = vmatpush1.msra.mxu0 0.0
        %751 = vmatprep.subr.mxu0 0.0
        %752 = vmatpush1.msra.mxu0 0.0
        %753 = vmatprep.subr.mxu0 0.0
        %754 = vmatpush1.msra.mxu0 0.0
        %755 = vmatprep.subr.mxu0 0.0
        %756 = vmatpush1.msra.mxu0 0.0
        %757 = vmatprep.subr.mxu0 0.0
        %758 = vmatpush1.msra.mxu0 0.0
        %759 = vmatprep.mubr.f32.mxu0 0.0
        %760 = vmatmul.mubr.f32.gmra.mrb[0].mxu0 %v693
        %v761 = vpop.f32.mrb[0].mxu0
        %v762 = vadd.f32 0.0, %v761
        %v763 = vpop.f32.mrb[0].mxu0
        %764 = vdwg.mxu0
        %v766 = vsel %vm335, %v685, 0
        %768 = vmatprep.subr.mxu0 0.0
        %769 = vmatpush1.msra.mxu0 %v332
        %770 = vmatprep.subr.mxu0 0.0
        %771 = vmatpush1.msra.mxu0 0.0
        %772 = vmatprep.subr.mxu0 0.0
        %773 = vmatpush1.msra.mxu0 0.0
        %774 = vmatprep.subr.mxu0 0.0
        %775 = vmatpush1.msra.mxu0 0.0
        %776 = vmatprep.subr.mxu0 0.0
        %777 = vmatpush1.msra.mxu0 0.0
        %778 = vmatprep.subr.mxu0 0.0
        %779 = vmatpush1.msra.mxu0 0.0
        %780 = vmatprep.subr.mxu0 0.0
        %781 = vmatpush1.msra.mxu0 0.0
        %782 = vmatprep.subr.mxu0 0.0
        %783 = vmatpush1.msra.mxu0 0.0
        %784 = vmatprep.subr.mxu0 0.0
        %785 = vmatpush1.msra.mxu0 0.0
        %786 = vmatprep.subr.mxu0 0.0
        %787 = vmatpush1.msra.mxu0 0.0
        %788 = vmatprep.subr.mxu0 0.0
        %789 = vmatpush1.msra.mxu0 0.0
        %790 = vmatprep.subr.mxu0 0.0
        %791 = vmatpush1.msra.mxu0 0.0
        %792 = vmatprep.subr.mxu0 0.0
        %793 = vmatpush1.msra.mxu0 0.0
        %794 = vmatprep.subr.mxu0 0.0
        %795 = vmatpush1.msra.mxu0 0.0
        %796 = vmatprep.subr.mxu0 0.0
        %797 = vmatpush1.msra.mxu0 0.0
        %798 = vmatprep.subr.mxu0 0.0
        %799 = vmatpush1.msra.mxu0 0.0
        %800 = vmatprep.subr.mxu0 0.0
        %801 = vmatpush1.msra.mxu0 0.0
        %802 = vmatprep.subr.mxu0 0.0
        %803 = vmatpush1.msra.mxu0 0.0
        %804 = vmatprep.subr.mxu0 0.0
        %805 = vmatpush1.msra.mxu0 0.0
        %806 = vmatprep.subr.mxu0 0.0
        %807 = vmatpush1.msra.mxu0 0.0
        %808 = vmatprep.subr.mxu0 0.0
        %809 = vmatpush1.msra.mxu0 0.0
        %810 = vmatprep.subr.mxu0 0.0
        %811 = vmatpush1.msra.mxu0 0.0
        %812 = vmatprep.subr.mxu0 0.0
        %813 = vmatpush1.msra.mxu0 0.0
        %814 = vmatprep.subr.mxu0 0.0
        %815 = vmatpush1.msra.mxu0 0.0
        %816 = vmatprep.subr.mxu0 0.0
        %817 = vmatpush1.msra.mxu0 0.0
        %818 = vmatprep.subr.mxu0 0.0
        %819 = vmatpush1.msra.mxu0 0.0
        %820 = vmatprep.subr.mxu0 0.0
        %821 = vmatpush1.msra.mxu0 0.0
        %822 = vmatprep.subr.mxu0 0.0
        %823 = vmatpush1.msra.mxu0 0.0
        %824 = vmatprep.subr.mxu0 0.0
        %825 = vmatpush1.msra.mxu0 0.0
        %826 = vmatprep.subr.mxu0 0.0
        %827 = vmatpush1.msra.mxu0 0.0
        %828 = vmatprep.subr.mxu0 0.0
        %829 = vmatpush1.msra.mxu0 0.0
        %830 = vmatprep.subr.mxu0 0.0
        %831 = vmatpush1.msra.mxu0 0.0
        %832 = vmatprep.mubr.f32.mxu0 0.0
        %833 = vmatmul.mubr.f32.gmra.mrb[0].mxu0 %v766
        %v834 = vpop.f32.mrb[0].mxu0
        %v835 = vadd.f32 0.0, %v834
        %v836 = vpop.f32.mrb[0].mxu0
        %837 = vdwg.mxu0
        %v839 = vsel %vm335, %v686, 0
        %841 = vmatprep.subr.mxu0 0.0
        %842 = vmatpush1.msra.mxu0 %v333
        %843 = vmatprep.subr.mxu0 0.0
        %844 = vmatpush1.msra.mxu0 0.0
        %845 = vmatprep.subr.mxu0 0.0
        %846 = vmatpush1.msra.mxu0 0.0
        %847 = vmatprep.subr.mxu0 0.0
        %848 = vmatpush1.msra.mxu0 0.0
        %849 = vmatprep.subr.mxu0 0.0
        %850 = vmatpush1.msra.mxu0 0.0
        %851 = vmatprep.subr.mxu0 0.0
        %852 = vmatpush1.msra.mxu0 0.0
        %853 = vmatprep.subr.mxu0 0.0
        %854 = vmatpush1.msra.mxu0 0.0
        %855 = vmatprep.subr.mxu0 0.0
        %856 = vmatpush1.msra.mxu0 0.0
        %857 = vmatprep.subr.mxu0 0.0
        %858 = vmatpush1.msra.mxu0 0.0
        %859 = vmatprep.subr.mxu0 0.0
        %860 = vmatpush1.msra.mxu0 0.0
        %861 = vmatprep.subr.mxu0 0.0
        %862 = vmatpush1.msra.mxu0 0.0
        %863 = vmatprep.subr.mxu0 0.0
        %864 = vmatpush1.msra.mxu0 0.0
        %865 = vmatprep.subr.mxu0 0.0
        %866 = vmatpush1.msra.mxu0 0.0
        %867 = vmatprep.subr.mxu0 0.0
        %868 = vmatpush1.msra.mxu0 0.0
        %869 = vmatprep.subr.mxu0 0.0
        %870 = vmatpush1.msra.mxu0 0.0
        %871 = vmatprep.subr.mxu0 0.0
        %872 = vmatpush1.msra.mxu0 0.0
        %873 = vmatprep.subr.mxu0 0.0
        %874 = vmatpush1.msra.mxu0 0.0
        %875 = vmatprep.subr.mxu0 0.0
        %876 = vmatpush1.msra.mxu0 0.0
        %877 = vmatprep.subr.mxu0 0.0
        %878 = vmatpush1.msra.mxu0 0.0
        %879 = vmatprep.subr.mxu0 0.0
        %880 = vmatpush1.msra.mxu0 0.0
        %881 = vmatprep.subr.mxu0 0.0
        %882 = vmatpush1.msra.mxu0 0.0
        %883 = vmatprep.subr.mxu0 0.0
        %884 = vmatpush1.msra.mxu0 0.0
        %885 = vmatprep.subr.mxu0 0.0
        %886 = vmatpush1.msra.mxu0 0.0
        %887 = vmatprep.subr.mxu0 0.0
        %888 = vmatpush1.msra.mxu0 0.0
        %889 = vmatprep.subr.mxu0 0.0
        %890 = vmatpush1.msra.mxu0 0.0
        %891 = vmatprep.subr.mxu0 0.0
        %892 = vmatpush1.msra.mxu0 0.0
        %893 = vmatprep.subr.mxu0 0.0
        %894 = vmatpush1.msra.mxu0 0.0
        %895 = vmatprep.subr.mxu0 0.0
        %896 = vmatpush1.msra.mxu0 0.0
        %897 = vmatprep.subr.mxu0 0.0
        %898 = vmatpush1.msra.mxu0 0.0
        %899 = vmatprep.subr.mxu0 0.0
        %900 = vmatpush1.msra.mxu0 0.0
        %901 = vmatprep.subr.mxu0 0.0
        %902 = vmatpush1.msra.mxu0 0.0
        %903 = vmatprep.subr.mxu0 0.0
        %904 = vmatpush1.msra.mxu0 0.0
        %905 = vmatprep.mubr.f32.mxu0 0.0
        %906 = vmatmul.mubr.f32.gmra.mrb[0].mxu0 %v839
        %v907 = vpop.f32.mrb[0].mxu0
        %v908 = vadd.f32 0.0, %v907
        %v909 = vpop.f32.mrb[0].mxu0
        %910 = vdwg.mxu0
        %v912 = vsel %vm335, %v687, 0
        %914 = vmatprep.subr.mxu0 0.0
        %915 = vmatpush1.msra.mxu0 %v334
        %916 = vmatprep.subr.mxu0 0.0
        %917 = vmatpush1.msra.mxu0 0.0
        %918 = vmatprep.subr.mxu0 0.0
        %919 = vmatpush1.msra.mxu0 0.0
        %920 = vmatprep.subr.mxu0 0.0
        %921 = vmatpush1.msra.mxu0 0.0
        %922 = vmatprep.subr.mxu0 0.0
        %923 = vmatpush1.msra.mxu0 0.0
        %924 = vmatprep.subr.mxu0 0.0
        %925 = vmatpush1.msra.mxu0 0.0
        %926 = vmatprep.subr.mxu0 0.0
        %927 = vmatpush1.msra.mxu0 0.0
        %928 = vmatprep.subr.mxu0 0.0
        %929 = vmatpush1.msra.mxu0 0.0
        %930 = vmatprep.subr.mxu0 0.0
        %931 = vmatpush1.msra.mxu0 0.0
        %932 = vmatprep.subr.mxu0 0.0
        %933 = vmatpush1.msra.mxu0 0.0
        %934 = vmatprep.subr.mxu0 0.0
        %935 = vmatpush1.msra.mxu0 0.0
        %936 = vmatprep.subr.mxu0 0.0
        %937 = vmatpush1.msra.mxu0 0.0
        %938 = vmatprep.subr.mxu0 0.0
        %939 = vmatpush1.msra.mxu0 0.0
        %940 = vmatprep.subr.mxu0 0.0
        %941 = vmatpush1.msra.mxu0 0.0
        %942 = vmatprep.subr.mxu0 0.0
        %943 = vmatpush1.msra.mxu0 0.0
        %944 = vmatprep.subr.mxu0 0.0
        %945 = vmatpush1.msra.mxu0 0.0
        %946 = vmatprep.subr.mxu0 0.0
        %947 = vmatpush1.msra.mxu0 0.0
        %948 = vmatprep.subr.mxu0 0.0
        %949 = vmatpush1.msra.mxu0 0.0
        %950 = vmatprep.subr.mxu0 0.0
        %951 = vmatpush1.msra.mxu0 0.0
        %952 = vmatprep.subr.mxu0 0.0
        %953 = vmatpush1.msra.mxu0 0.0
        %954 = vmatprep.subr.mxu0 0.0
        %955 = vmatpush1.msra.mxu0 0.0
        %956 = vmatprep.subr.mxu0 0.0
        %957 = vmatpush1.msra.mxu0 0.0
        %958 = vmatprep.subr.mxu0 0.0
        %959 = vmatpush1.msra.mxu0 0.0
        %960 = vmatprep.subr.mxu0 0.0
        %961 = vmatpush1.msra.mxu0 0.0
        %962 = vmatprep.subr.mxu0 0.0
        %963 = vmatpush1.msra.mxu0 0.0
        %964 = vmatprep.subr.mxu0 0.0
        %965 = vmatpush1.msra.mxu0 0.0
        %966 = vmatprep.subr.mxu0 0.0
        %967 = vmatpush1.msra.mxu0 0.0
        %968 = vmatprep.subr.mxu0 0.0
        %969 = vmatpush1.msra.mxu0 0.0
        %970 = vmatprep.subr.mxu0 0.0
        %971 = vmatpush1.msra.mxu0 0.0
        %972 = vmatprep.subr.mxu0 0.0
        %973 = vmatpush1.msra.mxu0 0.0
        %974 = vmatprep.subr.mxu0 0.0
        %975 = vmatpush1.msra.mxu0 0.0
        %976 = vmatprep.subr.mxu0 0.0
        %977 = vmatpush1.msra.mxu0 0.0
        %978 = vmatprep.mubr.f32.mxu0 0.0
        %979 = vmatmul.mubr.f32.gmra.mrb[0].mxu0 %v912
        %v980 = vpop.f32.mrb[0].mxu0
        %v981 = vadd.f32 0.0, %v980
        %v982 = vpop.f32.mrb[0].mxu0
        %983 = vdwg.mxu0
        %984 = vst.msk [vmem:[%s315] sm:$0xff] %vm335, %v762
        %985 = vst.msk [vmem:[%s315 + $0x8] sm:$0xff] %vm335, %v835
        %986 = vst.msk [vmem:[%s315 + $0x10] sm:$0xff] %vm335, %v908
        %987 = vst.msk [vmem:[%s315 + $0x18] sm:$0xff] %vm335, %v981
        %s988 = sand.u32 %s130, 1
        %s989 = scalar_lea.sflag [#allocation4], %s988
        %s990 = sand.u32 %s130, 1
        %s991 = smul.addr %s990, 32
        %s992 = scalar_lea.vmem [#allocation8], %s991
        %s993 = sand.u32 %s158, 1
        %s994 = scalar_lea.sflag [#allocation10], %s993
        %s995 = sand.u32 %s158, 1
        %s996 = smul.addr %s995, 32
        %s997 = scalar_lea.vmem [#allocation9], %s996
        // Predicated region
        $region45: #{tpu_custom_call.1} parent=31 // pred_check
          %p998 = pneg %p140
        $region46: #{tpu_custom_call.1} parent=31 // pred_check_branch
          %1000 = sbr.rel (%p998) target = $region48
        $region47: #{tpu_custom_call.1} parent=31 // pred_region
          %s1002 = ssub.s32 512, 512
          %1003 = vsyncadd %s989, %s1002
          %s1004 = smul.addr %s32, 4
          %s1005 = sadd.s32 %s33, %s1004
          %s1006 = smul.addr %s1005, 128
          %s1007 = scalar_lea.hbm %s3, %s1006
          %s1008 = sshll.u32 %s992, 4
          %s1009 = int_to_ptr.vmem [resolvable:$true] %s1008
          %1014 = dma.vmem_to_hbm [thread:$0]  %s1009, 512, %s1007, %s989, 128, 128, 8
        $region48: #{tpu_custom_call.1} parent=31 // pred_fallthru
          _
        // Predicated region
        $region49: #{tpu_custom_call.1} parent=31 // pred_check
          %p1015 = pneg %p168
        $region50: #{tpu_custom_call.1} parent=31 // pred_check_branch
          %1017 = sbr.rel (%p1015) target = $region52
        $region51: #{tpu_custom_call.1} parent=31 // pred_region
          %s1019 = ssub.s32 512, 512
          %1020 = vsyncadd %s994, %s1019
          %s1021 = smul.addr %s32, 4
          %s1022 = sadd.s32 %s33, %s1021
          %s1023 = smul.addr %s1022, 128
          %s1024 = scalar_lea.hbm %s4, %s1023
          %s1025 = sshll.u32 %s997, 4
          %s1026 = int_to_ptr.vmem [resolvable:$true] %s1025
          %1031 = dma.vmem_to_hbm [thread:$0]  %s1026, 512, %s1024, %s994, 128, 128, 8
        $region52: #{tpu_custom_call.1} parent=31 // pred_fallthru
          _
      $region32: #{tpu_custom_call.1} parent=5 // pred_fallthru
        _
      %p1032 = scmp.le.s32.totalorder 2, %s23
      // Predicated region
      $region53: #{tpu_custom_call.1} parent=5 // pred_check
        %p1033 = pneg %p1032
      $region54: #{tpu_custom_call.1} parent=5 // pred_check_branch
        %1035 = sbr.rel (%p1033) target = $region56
      $region55: #{tpu_custom_call.1} parent=5 // pred_region
        %s1036 = ssub.s32 %s23, 2
        // Predicated region
        $region57: #{tpu_custom_call.1} parent=55 // pred_check
          %p1037 = pneg %p146
        $region58: #{tpu_custom_call.1} parent=55 // pred_check_branch
          %1039 = sbr.rel (%p1037) target = $region60
        $region59: #{tpu_custom_call.1} parent=55 // pred_region
          %s1040 = sand.u32 %s131, 1
          %s1041 = scalar_lea.sflag [#allocation4], %s1040
          %s1042 = sand.u32 %s131, 1
          %s1043 = smul.addr %s1042, 32
          %s1044 = scalar_lea.vmem [#allocation8], %s1043
          %1045 = dma.done %s1041, 512
        $region60: #{tpu_custom_call.1} parent=55 // pred_fallthru
          _
        // Predicated region
        $region61: #{tpu_custom_call.1} parent=55 // pred_check
          %p1046 = pneg %p174
        $region62: #{tpu_custom_call.1} parent=55 // pred_check_branch
          %1048 = sbr.rel (%p1046) target = $region64
        $region63: #{tpu_custom_call.1} parent=55 // pred_region
          %s1049 = sand.u32 %s159, 1
          %s1050 = scalar_lea.sflag [#allocation10], %s1049
          %s1051 = sand.u32 %s159, 1
          %s1052 = smul.addr %s1051, 32
          %s1053 = scalar_lea.vmem [#allocation9], %s1052
          %1054 = dma.done %s1050, 512
        $region64: #{tpu_custom_call.1} parent=55 // pred_fallthru
          _
      $region56: #{tpu_custom_call.1} parent=5 // pred_fallthru
        _
    $region6: #{tpu_custom_call.1} parent=1 // loop_footer
      %s27 = sadd.s32 1, %s23
    $region7: #{tpu_custom_call.1} parent=1 // loop_footer_branch
      %22 = sbr.rel target = $region3
    $region8: #{tpu_custom_call.1} parent=1 // loop_exit
      _
    %1055 = vsyncpa [#allocation3], 1
    %s1056 = scalar_lea.sflag [#allocation3], 1
    %1057 = vsyncpa %s1056, 1
    %1058 = vsyncpa [#allocation6], 1
    %s1059 = scalar_lea.sflag [#allocation6], 1
    %1060 = vsyncpa %s1059, 1
    %1061 = vsyncpa [#allocation4], 1
    %s1062 = scalar_lea.sflag [#allocation4], 1
    %1063 = vsyncpa %s1062, 1
    %1064 = vsyncpa [#allocation10], 1
    %s1065 = scalar_lea.sflag [#allocation10], 1
    %1066 = vsyncpa %s1065, 1

</llo_original>
